<compile_context>
chip_gen: v7x
topology: tpu7x:2x2x1
jax: 0.10.0
libtpu: 0.0.40
codegen_flags: <defaults>
</compile_context>

<pallas_src>
import jax
import jax.numpy as jnp
from jax.experimental import pallas as pl
from jax.experimental.pallas import tpu as pltpu

P_PAD = 128  # lane-padded width of the 2-wide logistic head


def sentence_rnn_kernel(x_ref, h0_ref, c0_ref, w_ih_ref, w_hh_ref,
                        w_heads_hbm, b_ref, out_ref, w_heads_vmem, dma_sem):
    H = h0_ref.shape[-1]
    D = x_ref.shape[-1]

    # Start the late-use head-weight DMA now; it overlaps with the gate chain
    # (gate matmuls on the MXU + sigmoid/tanh on the EUP) and is waited on
    # only just before the heads matmul needs it.
    heads_cp = pltpu.make_async_copy(w_heads_hbm, w_heads_vmem, dma_sem)
    heads_cp.start()

    # ---- LSTM gates: x @ W_ih + h0 @ W_hh + (b_ih + b_hh), f32 accum ----
    gates = (jnp.dot(x_ref[...].astype(jnp.bfloat16), w_ih_ref[...],
                     preferred_element_type=jnp.float32)
             + jnp.dot(h0_ref[...].astype(jnp.bfloat16), w_hh_ref[...],
                       preferred_element_type=jnp.float32)
             + b_ref[:, 0:4 * H])                       # (B, 4H) f32

    i_g = jax.nn.sigmoid(gates[:, 0 * H:1 * H])
    f_g = jax.nn.sigmoid(gates[:, 1 * H:2 * H])
    g_g = jnp.tanh(gates[:, 2 * H:3 * H])
    o_g = jax.nn.sigmoid(gates[:, 3 * H:4 * H])

    c = f_g * c0_ref[...] + i_g * g_g                   # (B, H) f32
    h = o_g * jnp.tanh(c)                               # (B, H) f32

    # ---- fused heads: h @ [W_fc1@W_fc2 | W_log_pad] + [b_topic | b_log_pad] ----
    heads_cp.wait()
    head = (jnp.dot(h.astype(jnp.bfloat16), w_heads_vmem[...],
                    preferred_element_type=jnp.float32)
            + b_ref[:, 4 * H:])                         # (B, D+128) f32

    # ---- single lane-dense packed output: [topic | p_pad | h | c] ----
    out_ref[:, 0:D] = head[:, 0:D]                            # topic (fc2∘fc1 folded)
    out_ref[:, D:D + P_PAD] = jax.nn.sigmoid(head[:, D:])     # p, lanes 0:2 valid
    out_ref[:, D + P_PAD:D + P_PAD + H] = h
    out_ref[:, D + P_PAD + H:] = c


def init_params(key, hidden_size, topic_dim):
    """Deterministic params mirroring the PyTorch module.

    LSTM weights/biases: uniform(-1/sqrt(H), 1/sqrt(H)) (PyTorch default).
    logistic / fc1 / fc2 weights: uniform(-0.1, 0.1), biases zero.
    Returns (kernel_params, f32_params): kernel_params hold pre-transposed,
    fc1·fc2-folded, bf16 weights + a pre-broadcast f32 bias slab; f32_params
    hold the original (unfolded, f32) tensors for the reference check.
    Real checkpoints must populate b_fc1/b_log/b_fc2 before the fold.
    """
    H, D = hidden_size, topic_dim
    ks = jax.random.split(key, 7)
    bound = 1.0 / jnp.sqrt(jnp.float32(H))

    # Pre-transposed as (in, out) so kernels do plain x @ W.
    w_ih = jax.random.uniform(ks[0], (D, 4 * H), jnp.float32, -bound, bound)
    w_hh = jax.random.uniform(ks[1], (H, 4 * H), jnp.float32, -bound, bound)
    b_ih = jax.random.uniform(ks[2], (1, 4 * H), jnp.float32, -bound, bound)
    b_hh = jax.random.uniform(ks[3], (1, 4 * H), jnp.float32, -bound, bound)
    w_log = jax.random.uniform(ks[4], (H, 2), jnp.float32, -0.1, 0.1)
    w_fc1 = jax.random.uniform(ks[5], (H, D), jnp.float32, -0.1, 0.1)
    w_fc2 = jax.random.uniform(ks[6], (D, D), jnp.float32, -0.1, 0.1)
    b_log = jnp.zeros((1, 2), jnp.float32)
    b_fc1 = jnp.zeros((1, D), jnp.float32)
    b_fc2 = jnp.zeros((1, D), jnp.float32)

    # fc1·fc2 fold in f32 (no nonlinearity between them), cast once to bf16.
    w_topic = w_fc1 @ w_fc2                              # (H, D)
    b_topic = b_fc1 @ w_fc2 + b_fc2                      # (1, D)

    w_log_pad = jnp.zeros((H, P_PAD), jnp.float32).at[:, 0:2].set(w_log)
    b_log_pad = jnp.zeros((1, P_PAD), jnp.float32).at[:, 0:2].set(b_log)

    # Fused heads weight [W_topic | W_log_pad] -> (H, D+128), bf16.
    w_heads = jnp.concatenate([w_topic, w_log_pad], axis=1).astype(jnp.bfloat16)

    # Packed bias slab [b_gates | b_topic | b_log_pad], pre-broadcast to the
    # 8-sublane tile so the kernel never emits a sublane broadcast.
    bias_slab = jnp.concatenate([b_ih + b_hh, b_topic, b_log_pad], axis=1)
    bias_slab = jnp.tile(bias_slab, (8, 1))              # (8, 4H + D + 128) f32

    kernel_params = {
        "w_ih": w_ih.astype(jnp.bfloat16),
        "w_hh": w_hh.astype(jnp.bfloat16),
        "w_heads": w_heads,
        "biases": bias_slab,
    }
    f32_params = {"w_ih": w_ih, "w_hh": w_hh, "b_ih": b_ih, "b_hh": b_hh,
                  "w_log": w_log, "b_log": b_log, "w_fc1": w_fc1,
                  "b_fc1": b_fc1, "w_fc2": w_fc2, "b_fc2": b_fc2}
    return kernel_params, f32_params


def sentence_rnn_forward(pooling_vector, params, states=None):
    """JAX/Pallas equivalent of SentenceRNN.forward.

    pooling_vector: (B, topic_dim) float32
    states: optional ((1, B, H), (1, B, H)) — defaults to zeros.
    Returns (p, topic, (h_n, c_n)) with shapes
      p: (B, 1, 2), topic: (B, 1, topic_dim), h_n/c_n: (1, B, H).
    """
    B, D = pooling_vector.shape
    H = params["w_hh"].shape[0]

    if states is None:
        h0 = jnp.zeros((B, H), jnp.float32)
        c0 = jnp.zeros((B, H), jnp.float32)
    else:
        h0 = states[0].reshape(B, H).astype(jnp.float32)
        c0 = states[1].reshape(B, H).astype(jnp.float32)

    biases = params["biases"]
    if biases.shape[0] != B:  # stored pre-broadcast to 8 sublanes; adapt if B != 8
        biases = jnp.broadcast_to(biases[:1], (B, biases.shape[1]))

    out_width = D + P_PAD + 2 * H

    def full_spec(shape):
        return pl.BlockSpec(shape, lambda: (0,) * len(shape))

    # Advisory cost so XLA schedules surrounding ops around this tiny call.
    flops = 2 * B * (D + H) * 4 * H + 2 * B * H * (D + P_PAD)
    transcendentals = B * (4 * H + H + P_PAD)
    bytes_accessed = (
        2 * (params["w_ih"].size + params["w_hh"].size + params["w_heads"].size)
        + 4 * (pooling_vector.size + h0.size + c0.size + biases.size + B * out_width))
    cost = pl.CostEstimate(flops=flops, transcendentals=transcendentals,
                           bytes_accessed=bytes_accessed)

    packed = pl.pallas_call(
        sentence_rnn_kernel,
        out_shape=jax.ShapeDtypeStruct((B, out_width), jnp.float32),
        grid=(),
        in_specs=[full_spec(pooling_vector.shape),
                  full_spec(h0.shape),
                  full_spec(c0.shape),
                  full_spec(params["w_ih"].shape),
                  full_spec(params["w_hh"].shape),
                  pl.BlockSpec(memory_space=pl.ANY),     # w_heads: manual late DMA
                  full_spec(biases.shape)],
        out_specs=full_spec((B, out_width)),
        scratch_shapes=[pltpu.VMEM(params["w_heads"].shape, jnp.bfloat16),
                        pltpu.SemaphoreType.DMA],
        cost_estimate=cost,
    )(pooling_vector, h0, c0, params["w_ih"], params["w_hh"],
      params["w_heads"], biases)

    topic = packed[:, 0:D].reshape(B, 1, D)
    p = packed[:, D:D + 2].reshape(B, 1, 2)
    h_n = packed[:, D + P_PAD:D + P_PAD + H].reshape(1, B, H)
    c_n = packed[:, D + P_PAD + H:].reshape(1, B, H)
    return p, topic, (h_n, c_n)


def _reference_forward_f32(x, fp, states=None):
    """Pure-f32, unfolded reference with exact PyTorch-module semantics."""
    B, D = x.shape
    H = fp["w_hh"].shape[0]
    h0 = jnp.zeros((B, H)) if states is None else states[0].reshape(B, H)
    c0 = jnp.zeros((B, H)) if states is None else states[1].reshape(B, H)

    gates = x @ fp["w_ih"] + h0 @ fp["w_hh"] + fp["b_ih"] + fp["b_hh"]
    i = jax.nn.sigmoid(gates[:, 0 * H:1 * H])
    f = jax.nn.sigmoid(gates[:, 1 * H:2 * H])
    g = jnp.tanh(gates[:, 2 * H:3 * H])
    o = jax.nn.sigmoid(gates[:, 3 * H:4 * H])
    c = f * c0 + i * g
    h = o * jnp.tanh(c)

    p = jax.nn.sigmoid(h @ fp["w_log"] + fp["b_log"])
    topic = (h @ fp["w_fc1"] + fp["b_fc1"]) @ fp["w_fc2"] + fp["b_fc2"]
    return (p.reshape(B, 1, 2), topic.reshape(B, 1, D),
            (h.reshape(1, B, H), c.reshape(1, B, H)))


if __name__ == "__main__":
    # Small, TPU-friendly shapes consistent with the module's forward:
    # batch=8, hidden_size=128, topic_dim=128 (lane-aligned multiples of 128).
    B, H, D = 8, 128, 128

    key = jax.random.PRNGKey(0)
    k_params, k_x = jax.random.split(key)
    params, f32_params = init_params(k_params, hidden_size=H, topic_dim=D)
    pooling_vector = jax.random.normal(k_x, (B, D), jnp.float32)

    p, topic, (h_n, c_n) = sentence_rnn_forward(pooling_vector, params)
    jax.block_until_ready((p, topic, h_n, c_n))

    # Validate against a pure-f32, unfolded (PyTorch-semantics) reference.
    # bf16 weight quantization + fc1·fc2 fold give ~1e-3 level differences.
    p_ref, topic_ref, (h_ref, c_ref) = _reference_forward_f32(pooling_vector, f32_params)
    assert p.shape == (B, 1, 2) and topic.shape == (B, 1, D)
    assert h_n.shape == (1, B, H) and c_n.shape == (1, B, H)
    assert jnp.allclose(p, p_ref, atol=2e-2), jnp.abs(p - p_ref).max()
    assert jnp.allclose(topic, topic_ref, atol=2e-2), jnp.abs(topic - topic_ref).max()
    assert jnp.allclose(h_n, h_ref, atol=2e-2), jnp.abs(h_n - h_ref).max()
    assert jnp.allclose(c_n, c_ref, atol=2e-2), jnp.abs(c_n - c_ref).max()

    print("KERNEL_OK")
</pallas_src>

<mosaic_0001>
module attributes {stable_mosaic.version = 11 : i64} {
  func.func @sentence_rnn_kernel(%arg0: memref<8x128xf32, #tpu.memory_space<vmem>>, %arg1: memref<8x128xf32, #tpu.memory_space<vmem>>, %arg2: memref<8x128xf32, #tpu.memory_space<vmem>>, %arg3: memref<128x512xbf16, #tpu.memory_space<vmem>>, %arg4: memref<128x512xbf16, #tpu.memory_space<vmem>>, %arg5: memref<128x256xbf16, #tpu.memory_space<any>>, %arg6: memref<8x768xf32, #tpu.memory_space<vmem>>, %arg7: memref<8x512xf32, #tpu.memory_space<vmem>>, %arg8: memref<128x256xbf16, #tpu.memory_space<vmem>>, %arg9: memref<!tpu.dma_semaphore, #tpu.memory_space<semaphore_mem>>) attributes {dimension_semantics = [], scalar_prefetch = 0 : i64, scratch_operands = 2 : i64, tpu.core_type = #tpu.core_type<tc>} {
    tpu.enqueue_dma source(%arg5 : memref<128x256xbf16, #tpu.memory_space<any>>) target(%arg8 : memref<128x256xbf16, #tpu.memory_space<vmem>>) target_semaphore(%arg9 : memref<!tpu.dma_semaphore, #tpu.memory_space<semaphore_mem>>)
    %c0 = arith.constant 0 : index
    %c0_0 = arith.constant 0 : index
    %0 = vector.load %arg0[%c0, %c0_0] : memref<8x128xf32, #tpu.memory_space<vmem>>, vector<8x128xf32>
    %1 = arith.truncf %0 : vector<8x128xf32> to vector<8x128xbf16>
    %c0_1 = arith.constant 0 : index
    %c0_2 = arith.constant 0 : index
    %2 = vector.load %arg3[%c0_1, %c0_2] : memref<128x512xbf16, #tpu.memory_space<vmem>>, vector<128x512xbf16>
    %cst = arith.constant dense<0.000000e+00> : vector<8x512xf32>
    %3 = tpu.matmul %1, %2, %cst {dimension_numbers = #tpu.dot_dimension_numbers<[1], [0], [0], [1], [0, 0, 1, 1], [], []>} : vector<8x128xbf16>, vector<128x512xbf16>, vector<8x512xf32> -> vector<8x512xf32>
    %c0_3 = arith.constant 0 : index
    %c0_4 = arith.constant 0 : index
    %4 = vector.load %arg1[%c0_3, %c0_4] : memref<8x128xf32, #tpu.memory_space<vmem>>, vector<8x128xf32>
    %5 = arith.truncf %4 : vector<8x128xf32> to vector<8x128xbf16>
    %c0_5 = arith.constant 0 : index
    %c0_6 = arith.constant 0 : index
    %6 = vector.load %arg4[%c0_5, %c0_6] : memref<128x512xbf16, #tpu.memory_space<vmem>>, vector<128x512xbf16>
    %cst_7 = arith.constant dense<0.000000e+00> : vector<8x512xf32>
    %7 = tpu.matmul %5, %6, %cst_7 {dimension_numbers = #tpu.dot_dimension_numbers<[1], [0], [0], [1], [0, 0, 1, 1], [], []>} : vector<8x128xbf16>, vector<128x512xbf16>, vector<8x512xf32> -> vector<8x512xf32>
    %8 = arith.addf %3, %7 : vector<8x512xf32>
    %c0_8 = arith.constant 0 : index
    %c0_9 = arith.constant 0 : index
    %9 = vector.load %arg6[%c0_8, %c0_9] : memref<8x768xf32, #tpu.memory_space<vmem>>, vector<8x512xf32>
    %10 = arith.addf %8, %9 : vector<8x512xf32>
    %11 = vector.extract_strided_slice %10 {offsets = [0, 0], sizes = [8, 128], strides = [1, 1]} : vector<8x512xf32> to vector<8x128xf32>
    %12 = arith.negf %11 : vector<8x128xf32>
    %13 = math.exp %12 : vector<8x128xf32>
    %cst_10 = arith.constant 1.000000e+00 : f32
    %14 = vector.broadcast %cst_10 : f32 to vector<8x128xf32>
    %15 = arith.addf %14, %13 : vector<8x128xf32>
    %16 = arith.divf %14, %15 : vector<8x128xf32>
    %17 = vector.extract_strided_slice %10 {offsets = [0, 128], sizes = [8, 128], strides = [1, 1]} : vector<8x512xf32> to vector<8x128xf32>
    %18 = arith.negf %17 : vector<8x128xf32>
    %19 = math.exp %18 : vector<8x128xf32>
    %cst_11 = arith.constant 1.000000e+00 : f32
    %20 = vector.broadcast %cst_11 : f32 to vector<8x128xf32>
    %21 = arith.addf %20, %19 : vector<8x128xf32>
    %22 = arith.divf %20, %21 : vector<8x128xf32>
    %23 = vector.extract_strided_slice %10 {offsets = [0, 256], sizes = [8, 128], strides = [1, 1]} : vector<8x512xf32> to vector<8x128xf32>
    %24 = math.tanh %23 : vector<8x128xf32>
    %25 = vector.extract_strided_slice %10 {offsets = [0, 384], sizes = [8, 128], strides = [1, 1]} : vector<8x512xf32> to vector<8x128xf32>
    %26 = arith.negf %25 : vector<8x128xf32>
    %27 = math.exp %26 : vector<8x128xf32>
    %cst_12 = arith.constant 1.000000e+00 : f32
    %28 = vector.broadcast %cst_12 : f32 to vector<8x128xf32>
    %29 = arith.addf %28, %27 : vector<8x128xf32>
    %30 = arith.divf %28, %29 : vector<8x128xf32>
    %c0_13 = arith.constant 0 : index
    %c0_14 = arith.constant 0 : index
    %31 = vector.load %arg2[%c0_13, %c0_14] : memref<8x128xf32, #tpu.memory_space<vmem>>, vector<8x128xf32>
    %32 = arith.mulf %22, %31 : vector<8x128xf32>
    %33 = arith.mulf %16, %24 : vector<8x128xf32>
    %34 = arith.addf %32, %33 : vector<8x128xf32>
    %35 = math.tanh %34 : vector<8x128xf32>
    %36 = arith.mulf %30, %35 : vector<8x128xf32>
    tpu.wait_dma2 semaphore(%arg9 : memref<!tpu.dma_semaphore, #tpu.memory_space<semaphore_mem>>) src(%arg5 : memref<128x256xbf16, #tpu.memory_space<any>>) dst(%arg8 : memref<128x256xbf16, #tpu.memory_space<vmem>>)
    %37 = arith.truncf %36 : vector<8x128xf32> to vector<8x128xbf16>
    %c0_15 = arith.constant 0 : index
    %c0_16 = arith.constant 0 : index
    %38 = vector.load %arg8[%c0_15, %c0_16] : memref<128x256xbf16, #tpu.memory_space<vmem>>, vector<128x256xbf16>
    %cst_17 = arith.constant dense<0.000000e+00> : vector<8x256xf32>
    %39 = tpu.matmul %37, %38, %cst_17 {dimension_numbers = #tpu.dot_dimension_numbers<[1], [0], [0], [1], [0, 0, 1, 1], [], []>} : vector<8x128xbf16>, vector<128x256xbf16>, vector<8x256xf32> -> vector<8x256xf32>
    %c0_18 = arith.constant 0 : index
    %c512 = arith.constant 512 : index
    %40 = vector.load %arg6[%c0_18, %c512] : memref<8x768xf32, #tpu.memory_space<vmem>>, vector<8x256xf32>
    %41 = arith.addf %39, %40 : vector<8x256xf32>
    %42 = vector.extract_strided_slice %41 {offsets = [0, 0], sizes = [8, 128], strides = [1, 1]} : vector<8x256xf32> to vector<8x128xf32>
    %c0_19 = arith.constant 0 : index
    %c0_20 = arith.constant 0 : index
    %43 = vector.load %arg7[%c0_19, %c0_20] : memref<8x512xf32, #tpu.memory_space<vmem>>, vector<8x128xf32>
    tpu.vector_store %arg7[%c0_19, %c0_20], %42 {strides = array<i32>} : memref<8x512xf32, #tpu.memory_space<vmem>>, vector<8x128xf32>,
    %44 = vector.extract_strided_slice %41 {offsets = [0, 128], sizes = [8, 128], strides = [1, 1]} : vector<8x256xf32> to vector<8x128xf32>
    %45 = arith.negf %44 : vector<8x128xf32>
    %46 = math.exp %45 : vector<8x128xf32>
    %cst_21 = arith.constant 1.000000e+00 : f32
    %47 = vector.broadcast %cst_21 : f32 to vector<8x128xf32>
    %48 = arith.addf %47, %46 : vector<8x128xf32>
    %49 = arith.divf %47, %48 : vector<8x128xf32>
    %c0_22 = arith.constant 0 : index
    %c128 = arith.constant 128 : index
    %50 = vector.load %arg7[%c0_22, %c128] : memref<8x512xf32, #tpu.memory_space<vmem>>, vector<8x128xf32>
    tpu.vector_store %arg7[%c0_22, %c128], %49 {strides = array<i32>} : memref<8x512xf32, #tpu.memory_space<vmem>>, vector<8x128xf32>,
    %c0_23 = arith.constant 0 : index
    %c256 = arith.constant 256 : index
    %51 = vector.load %arg7[%c0_23, %c256] : memref<8x512xf32, #tpu.memory_space<vmem>>, vector<8x128xf32>
    tpu.vector_store %arg7[%c0_23, %c256], %36 {strides = array<i32>} : memref<8x512xf32, #tpu.memory_space<vmem>>, vector<8x128xf32>,
    %c0_24 = arith.constant 0 : index
    %c384 = arith.constant 384 : index
    %52 = vector.load %arg7[%c0_24, %c384] : memref<8x512xf32, #tpu.memory_space<vmem>>, vector<8x128xf32>
    tpu.vector_store %arg7[%c0_24, %c384], %34 {strides = array<i32>} : memref<8x512xf32, #tpu.memory_space<vmem>>, vector<8x128xf32>,
    return
  }
}

</mosaic_0001>

<llo_original>
// kernel: tpu_custom_call.1
$region0: #{tpu_custom_call.1}
  #allocation0 [shape = 'u32[]', space=smem, size = 0x4, offset = 0x4, fixed_abs, tag = 'smem constant byte address 0x4 - core index']
  #allocation1 [shape = 'u32[144,128]{1,0:T(1,128)}', space=vmem, size = 0x12000, scoped, tag = 'internal scratch']
  #allocation2 [shape = 'bf16[128,256]{1,0:T(16,128)(2,1)}', space=vmem, size = 0x10000, scoped, tag = 'scratch operand']
  #allocation3 [shape = 's32[1]{0}', space=sflag, size = 0x4, scoped, tag = 'scratch operand']
  #allocation16 [shape = 's32[]', space=sflag, size = 0x4, offset = 0, fixed_abs, tag = 'sflag constant byte address 0x0 - dummy sync flag']
  %s0 = inlined_call_operand.hbm [shape: f32[8,128], index: 0, kind: input, shape index: {}]
  %s1 = inlined_call_operand.hbm [shape: f32[8,128], index: 1, kind: input, shape index: {}]
  %s2 = inlined_call_operand.hbm [shape: f32[8,128], index: 2, kind: input, shape index: {}]
  %s3 = inlined_call_operand.hbm [shape: bf16[128,512], index: 3, kind: input, shape index: {}]
  %s4 = inlined_call_operand.hbm [shape: bf16[128,512], index: 4, kind: input, shape index: {}]
  %s5 = inlined_call_operand.hbm [shape: bf16[128,256], index: 5, kind: input, shape index: {}]
  %s6 = inlined_call_operand.hbm [shape: f32[8,768], index: 6, kind: input, shape index: {}]
  %s7 = inlined_call_operand.hbm [shape: f32[8,512], index: 7, kind: output, shape index: {}]
  %s8 = sld [smem:[#allocation0]]
  $region58: #{tpu_custom_call.1} parent=0
    _
  %s10 = ssub.s32 1, %s8
  %s11 = scalar_select 0, %s10, %s8
  $region1: #{tpu_custom_call.1} parent=0
    #allocation4 [shape = 'u8[4096]{0}', space=vmem, size = 0x1000, scoped, tag = 'input window, operand 0, single buffered']
    #allocation5 [shape = 's32[1]{0}', space=sflag, size = 0x4, scoped, tag = 'scoped memory for tpu_custom_call.1']
    #allocation6 [shape = 's32[1]{0}', space=sflag, size = 0x4, scoped, tag = 'scoped memory for tpu_custom_call.1']
    #allocation7 [shape = 'u8[4096]{0}', space=vmem, size = 0x1000, scoped, tag = 'input window, operand 1, single buffered']
    #allocation8 [shape = 's32[1]{0}', space=sflag, size = 0x4, scoped, tag = 'scoped memory for tpu_custom_call.1']
    #allocation9 [shape = 'u8[4096]{0}', space=vmem, size = 0x1000, scoped, tag = 'input window, operand 2, single buffered']
    #allocation10 [shape = 'u8[131072]{0}', space=vmem, size = 0x20000, scoped, tag = 'input window, operand 3, single buffered']
    #allocation11 [shape = 's32[1]{0}', space=sflag, size = 0x4, scoped, tag = 'scoped memory for tpu_custom_call.1']
    #allocation12 [shape = 'u8[131072]{0}', space=vmem, size = 0x20000, scoped, tag = 'input window, operand 4, single buffered']
    #allocation13 [shape = 'u8[24576]{0}', space=vmem, size = 0x6000, scoped, tag = 'input window, operand 6, single buffered']
    #allocation14 [shape = 's32[1]{0}', space=sflag, size = 0x4, scoped, tag = 'scoped memory for tpu_custom_call.1']
    #allocation15 [shape = 'u8[16384]{0}', space=vmem, size = 0x4000, scoped, tag = 'output window, operand 0, single buffered']
    #allocation17 [shape = 'u32[9]{0}', space=smem, size = 0x24, scoped, tag = 'DMA stride descriptor']
    %12 = vsyncpa [#allocation5], 0
    %13 = vsyncpa [#allocation8], 0
    %14 = vsyncpa [#allocation11], 0
    %15 = vsyncpa [#allocation14], 0
    %16 = vsyncpa [#allocation6], 0
    // Predicated region
    $region2: #{tpu_custom_call.1} parent=1 // pred_check
      _
    $region3: #{tpu_custom_call.1} parent=1 // pred_check_branch
      %18 = sbr.rel (0) target = $region5
    $region4: #{tpu_custom_call.1} parent=1 // pred_region
      %s20 = ssub.s32 128, 128
      %21 = vsyncadd [#allocation5], %s20
      %s23 = sshll.u32 [#allocation4], 4
      %s24 = int_to_ptr.vmem [resolvable:$true] %s23
      %26 = dma.hbm_to_vmem [thread:$0]  %s0, 128, %s24, [#allocation5]
    $region5: #{tpu_custom_call.1} parent=1 // pred_fallthru
      _
    // Predicated region
    $region6: #{tpu_custom_call.1} parent=1 // pred_check
      _
    $region7: #{tpu_custom_call.1} parent=1 // pred_check_branch
      %28 = sbr.rel (0) target = $region9
    $region8: #{tpu_custom_call.1} parent=1 // pred_region
      %s30 = ssub.s32 128, 128
      %31 = vsyncadd [#allocation8], %s30
      %s33 = sshll.u32 [#allocation7], 4
      %s34 = int_to_ptr.vmem [resolvable:$true] %s33
      %36 = dma.hbm_to_vmem [thread:$0]  %s1, 128, %s34, [#allocation8]
    $region9: #{tpu_custom_call.1} parent=1 // pred_fallthru
      _
    // Predicated region
    $region10: #{tpu_custom_call.1} parent=1 // pred_check
      _
    $region11: #{tpu_custom_call.1} parent=1 // pred_check_branch
      %38 = sbr.rel (0) target = $region13
    $region12: #{tpu_custom_call.1} parent=1 // pred_region
      %s40 = ssub.s32 128, 128
      %41 = vsyncadd [#allocation8], %s40
      %s43 = sshll.u32 [#allocation9], 4
      %s44 = int_to_ptr.vmem [resolvable:$true] %s43
      %46 = dma.hbm_to_vmem [thread:$0]  %s2, 128, %s44, [#allocation8]
    $region13: #{tpu_custom_call.1} parent=1 // pred_fallthru
      _
    // Predicated region
    $region14: #{tpu_custom_call.1} parent=1 // pred_check
      _
    $region15: #{tpu_custom_call.1} parent=1 // pred_check_branch
      %48 = sbr.rel (0) target = $region17
    $region16: #{tpu_custom_call.1} parent=1 // pred_region
      %s50 = ssub.s32 4096, 4096
      %51 = vsyncadd [#allocation11], %s50
      %s52 = sshll.u32 [#allocation10], 4
      %s53 = int_to_ptr.vmem [resolvable:$true] %s52
      %58 = dma.hbm_to_vmem [thread:$0]  %s3, 4096, %s53, [#allocation11], 256, 256, 16
    $region17: #{tpu_custom_call.1} parent=1 // pred_fallthru
      _
    // Predicated region
    $region18: #{tpu_custom_call.1} parent=1 // pred_check
      _
    $region19: #{tpu_custom_call.1} parent=1 // pred_check_branch
      %60 = sbr.rel (0) target = $region21
    $region20: #{tpu_custom_call.1} parent=1 // pred_region
      %s62 = ssub.s32 4096, 4096
      %63 = vsyncadd [#allocation11], %s62
      %s64 = sshll.u32 [#allocation12], 4
      %s65 = int_to_ptr.vmem [resolvable:$true] %s64
      %70 = dma.hbm_to_vmem [thread:$0]  %s4, 4096, %s65, [#allocation11], 256, 256, 16
    $region21: #{tpu_custom_call.1} parent=1 // pred_fallthru
      _
    // Predicated region
    $region22: #{tpu_custom_call.1} parent=1 // pred_check
      _
    $region23: #{tpu_custom_call.1} parent=1 // pred_check_branch
      %72 = sbr.rel (0) target = $region25
    $region24: #{tpu_custom_call.1} parent=1 // pred_region
      %s74 = ssub.s32 768, 768
      %75 = vsyncadd [#allocation14], %s74
      %s77 = sshll.u32 [#allocation13], 4
      %s78 = int_to_ptr.vmem [resolvable:$true] %s77
      %80 = dma.hbm_to_vmem [thread:$0]  %s6, 768, %s78, [#allocation14]
    $region25: #{tpu_custom_call.1} parent=1 // pred_fallthru
      _
    // Predicated region
    $region26: #{tpu_custom_call.1} parent=1 // pred_check
      _
    $region27: #{tpu_custom_call.1} parent=1 // pred_check_branch
      %82 = sbr.rel (0) target = $region29
    $region28: #{tpu_custom_call.1} parent=1 // pred_region
      %83 = dma.done [#allocation5], 128
    $region29: #{tpu_custom_call.1} parent=1 // pred_fallthru
      _
    // Predicated region
    $region30: #{tpu_custom_call.1} parent=1 // pred_check
      _
    $region31: #{tpu_custom_call.1} parent=1 // pred_check_branch
      %85 = sbr.rel (0) target = $region33
    $region32: #{tpu_custom_call.1} parent=1 // pred_region
      %86 = dma.done [#allocation8], 128
    $region33: #{tpu_custom_call.1} parent=1 // pred_fallthru
      _
    // Predicated region
    $region34: #{tpu_custom_call.1} parent=1 // pred_check
      _
    $region35: #{tpu_custom_call.1} parent=1 // pred_check_branch
      %88 = sbr.rel (0) target = $region37
    $region36: #{tpu_custom_call.1} parent=1 // pred_region
      %89 = dma.done [#allocation8], 128
    $region37: #{tpu_custom_call.1} parent=1 // pred_fallthru
      _
    // Predicated region
    $region38: #{tpu_custom_call.1} parent=1 // pred_check
      _
    $region39: #{tpu_custom_call.1} parent=1 // pred_check_branch
      %91 = sbr.rel (0) target = $region41
    $region40: #{tpu_custom_call.1} parent=1 // pred_region
      %92 = dma.done [#allocation11], 4096
    $region41: #{tpu_custom_call.1} parent=1 // pred_fallthru
      _
    // Predicated region
    $region42: #{tpu_custom_call.1} parent=1 // pred_check
      _
    $region43: #{tpu_custom_call.1} parent=1 // pred_check_branch
      %94 = sbr.rel (0) target = $region45
    $region44: #{tpu_custom_call.1} parent=1 // pred_region
      %95 = dma.done [#allocation11], 4096
    $region45: #{tpu_custom_call.1} parent=1 // pred_fallthru
      _
    // Predicated region
    $region46: #{tpu_custom_call.1} parent=1 // pred_check
      _
    $region47: #{tpu_custom_call.1} parent=1 // pred_check_branch
      %97 = sbr.rel (0) target = $region49
    $region48: #{tpu_custom_call.1} parent=1 // pred_region
      %98 = dma.done [#allocation14], 768
    $region49: #{tpu_custom_call.1} parent=1 // pred_fallthru
      _
    %s101 = sshll.u32 1, 14
    %s102 = sxor.u32 4294967295, %s101
    %s104 = sld [smem:[#allocation0]]
    %s105 = sadd.s32 2, %s104
    %s107 = sshll.u32 7, 26
    %s108 = sxor.u32 4294967295, %s107
    %s109 = sand.u32 0, %s108
    %s110 = sshll.u32 %s105, 26
    %s111 = sor.u32 %s109, %s110
    %s112 = sshll.u32 [#allocation2], 4
    %s113 = int_to_ptr.vmem [resolvable:$true] %s112
    %116 = sst [smem:[#allocation17]] 256
    %s117 = scalar_lea.smem [#allocation17], 1
    %118 = sst [smem:[%s117]] 256
    %s119 = scalar_lea.smem [#allocation17], 2
    %120 = sst [smem:[%s119]] 2
    %s121 = scalar_lea.smem [#allocation17], 3
    %122 = sst [smem:[%s121]] 64
    %s123 = scalar_lea.smem [#allocation17], 4
    %124 = sst [smem:[%s123]] 128
    %s125 = scalar_lea.smem [#allocation17], 5
    %126 = sst [smem:[%s125]] 2
    %s127 = scalar_lea.smem [#allocation17], 6
    %128 = sst [smem:[%s127]] 128
    %s129 = scalar_lea.smem [#allocation17], 7
    %130 = sst [smem:[%s129]] 64
    %s131 = scalar_lea.smem [#allocation17], 8
    %132 = sst [smem:[%s131]] 4
    %134 = dma.general %s5, 2048, %s113, [#allocation3], [#allocation16], [#allocation17], %s111, 0
    %v135 = vld [vmem:[#allocation4] sm:$0xff]
    %v136 = vpack.c.bf16 %v135, %v135
    %v137 = vld [vmem:[#allocation10] sm:$0xff]
    %v138 = vld [vmem:[#allocation10 + $0x8] sm:$0xff]
    %v139 = vld [vmem:[#allocation10 + $0x10] sm:$0xff]
    %v140 = vld [vmem:[#allocation10 + $0x18] sm:$0xff]
    %v141 = vld [vmem:[#allocation10 + $0x20] sm:$0xff]
    %v142 = vld [vmem:[#allocation10 + $0x28] sm:$0xff]
    %v143 = vld [vmem:[#allocation10 + $0x30] sm:$0xff]
    %v144 = vld [vmem:[#allocation10 + $0x38] sm:$0xff]
    %v145 = vld [vmem:[#allocation10 + $0x40] sm:$0xff]
    %v146 = vld [vmem:[#allocation10 + $0x48] sm:$0xff]
    %v147 = vld [vmem:[#allocation10 + $0x50] sm:$0xff]
    %v148 = vld [vmem:[#allocation10 + $0x58] sm:$0xff]
    %v149 = vld [vmem:[#allocation10 + $0x60] sm:$0xff]
    %v150 = vld [vmem:[#allocation10 + $0x68] sm:$0xff]
    %v151 = vld [vmem:[#allocation10 + $0x70] sm:$0xff]
    %v152 = vld [vmem:[#allocation10 + $0x78] sm:$0xff]
    %v153 = vld [vmem:[#allocation10 + $0x80] sm:$0xff]
    %v154 = vld [vmem:[#allocation10 + $0x88] sm:$0xff]
    %v155 = vld [vmem:[#allocation10 + $0x90] sm:$0xff]
    %v156 = vld [vmem:[#allocation10 + $0x98] sm:$0xff]
    %v157 = vld [vmem:[#allocation10 + $0xa0] sm:$0xff]
    %v158 = vld [vmem:[#allocation10 + $0xa8] sm:$0xff]
    %v159 = vld [vmem:[#allocation10 + $0xb0] sm:$0xff]
    %v160 = vld [vmem:[#allocation10 + $0xb8] sm:$0xff]
    %v161 = vld [vmem:[#allocation10 + $0xc0] sm:$0xff]
    %v162 = vld [vmem:[#allocation10 + $0xc8] sm:$0xff]
    %v163 = vld [vmem:[#allocation10 + $0xd0] sm:$0xff]
    %v164 = vld [vmem:[#allocation10 + $0xd8] sm:$0xff]
    %v165 = vld [vmem:[#allocation10 + $0xe0] sm:$0xff]
    %v166 = vld [vmem:[#allocation10 + $0xe8] sm:$0xff]
    %v167 = vld [vmem:[#allocation10 + $0xf0] sm:$0xff]
    %v168 = vld [vmem:[#allocation10 + $0xf8] sm:$0xff]
    %v169 = vld [vmem:[#allocation7] sm:$0xff]
    %v170 = vpack.c.bf16 %v169, %v169
    %v171 = vld [vmem:[#allocation12] sm:$0xff]
    %v172 = vld [vmem:[#allocation12 + $0x8] sm:$0xff]
    %v173 = vld [vmem:[#allocation12 + $0x10] sm:$0xff]
    %v174 = vld [vmem:[#allocation12 + $0x18] sm:$0xff]
    %v175 = vld [vmem:[#allocation12 + $0x20] sm:$0xff]
    %v176 = vld [vmem:[#allocation12 + $0x28] sm:$0xff]
    %v177 = vld [vmem:[#allocation12 + $0x30] sm:$0xff]
    %v178 = vld [vmem:[#allocation12 + $0x38] sm:$0xff]
    %v179 = vld [vmem:[#allocation12 + $0x40] sm:$0xff]
    %v180 = vld [vmem:[#allocation12 + $0x48] sm:$0xff]
    %v181 = vld [vmem:[#allocation12 + $0x50] sm:$0xff]
    %v182 = vld [vmem:[#allocation12 + $0x58] sm:$0xff]
    %v183 = vld [vmem:[#allocation12 + $0x60] sm:$0xff]
    %v184 = vld [vmem:[#allocation12 + $0x68] sm:$0xff]
    %v185 = vld [vmem:[#allocation12 + $0x70] sm:$0xff]
    %v186 = vld [vmem:[#allocation12 + $0x78] sm:$0xff]
    %v187 = vld [vmem:[#allocation12 + $0x80] sm:$0xff]
    %v188 = vld [vmem:[#allocation12 + $0x88] sm:$0xff]
    %v189 = vld [vmem:[#allocation12 + $0x90] sm:$0xff]
    %v190 = vld [vmem:[#allocation12 + $0x98] sm:$0xff]
    %v191 = vld [vmem:[#allocation12 + $0xa0] sm:$0xff]
    %v192 = vld [vmem:[#allocation12 + $0xa8] sm:$0xff]
    %v193 = vld [vmem:[#allocation12 + $0xb0] sm:$0xff]
    %v194 = vld [vmem:[#allocation12 + $0xb8] sm:$0xff]
    %v195 = vld [vmem:[#allocation12 + $0xc0] sm:$0xff]
    %v196 = vld [vmem:[#allocation12 + $0xc8] sm:$0xff]
    %v197 = vld [vmem:[#allocation12 + $0xd0] sm:$0xff]
    %v198 = vld [vmem:[#allocation12 + $0xd8] sm:$0xff]
    %v199 = vld [vmem:[#allocation12 + $0xe0] sm:$0xff]
    %v200 = vld [vmem:[#allocation12 + $0xe8] sm:$0xff]
    %v201 = vld [vmem:[#allocation12 + $0xf0] sm:$0xff]
    %v202 = vld [vmem:[#allocation12 + $0xf8] sm:$0xff]
    %v235 = vunpack.c.l.b16 %v171
    %v236 = vunpack.c.h.b16 %v171
    %v237 = vunpack.c.l.b16 %v172
    %v238 = vunpack.c.h.b16 %v172
    %v239 = vunpack.c.l.b16 %v173
    %v240 = vunpack.c.h.b16 %v173
    %v241 = vunpack.c.l.b16 %v174
    %v242 = vunpack.c.h.b16 %v174
    %v243 = vunpack.c.l.b16 %v175
    %v244 = vunpack.c.h.b16 %v175
    %v245 = vunpack.c.l.b16 %v176
    %v246 = vunpack.c.h.b16 %v176
    %v247 = vunpack.c.l.b16 %v177
    %v248 = vunpack.c.h.b16 %v177
    %v249 = vunpack.c.l.b16 %v178
    %v250 = vunpack.c.h.b16 %v178
    %v251 = vunpack.c.l.b16 %v179
    %v252 = vunpack.c.h.b16 %v179
    %v253 = vunpack.c.l.b16 %v180
    %v254 = vunpack.c.h.b16 %v180
    %v255 = vunpack.c.l.b16 %v181
    %v256 = vunpack.c.h.b16 %v181
    %v257 = vunpack.c.l.b16 %v182
    %v258 = vunpack.c.h.b16 %v182
    %v259 = vunpack.c.l.b16 %v183
    %v260 = vunpack.c.h.b16 %v183
    %v261 = vunpack.c.l.b16 %v184
    %v262 = vunpack.c.h.b16 %v184
    %v263 = vunpack.c.l.b16 %v185
    %v264 = vunpack.c.h.b16 %v185
    %v265 = vunpack.c.l.b16 %v186
    %v266 = vunpack.c.h.b16 %v186
    %v267 = vunpack.c.l.b16 %v187
    %v268 = vunpack.c.h.b16 %v187
    %v269 = vunpack.c.l.b16 %v188
    %v270 = vunpack.c.h.b16 %v188
    %v271 = vunpack.c.l.b16 %v189
    %v272 = vunpack.c.h.b16 %v189
    %v273 = vunpack.c.l.b16 %v190
    %v274 = vunpack.c.h.b16 %v190
    %v275 = vunpack.c.l.b16 %v191
    %v276 = vunpack.c.h.b16 %v191
    %v277 = vunpack.c.l.b16 %v192
    %v278 = vunpack.c.h.b16 %v192
    %v279 = vunpack.c.l.b16 %v193
    %v280 = vunpack.c.h.b16 %v193
    %v281 = vunpack.c.l.b16 %v194
    %v282 = vunpack.c.h.b16 %v194
    %v283 = vunpack.c.l.b16 %v195
    %v284 = vunpack.c.h.b16 %v195
    %v285 = vunpack.c.l.b16 %v196
    %v286 = vunpack.c.h.b16 %v196
    %v287 = vunpack.c.l.b16 %v197
    %v288 = vunpack.c.h.b16 %v197
    %v289 = vunpack.c.l.b16 %v198
    %v290 = vunpack.c.h.b16 %v198
    %v291 = vunpack.c.l.b16 %v199
    %v292 = vunpack.c.h.b16 %v199
    %v293 = vunpack.c.l.b16 %v200
    %v294 = vunpack.c.h.b16 %v200
    %v295 = vunpack.c.l.b16 %v201
    %v296 = vunpack.c.h.b16 %v201
    %v297 = vunpack.c.l.b16 %v202
    %v298 = vunpack.c.h.b16 %v202
    %v299 = vpack.c.b16 %v239, %v235
    %v300 = vpack.c.b16 %v240, %v236
    %v301 = vpack.c.b16 %v241, %v237
    %v302 = vpack.c.b16 %v242, %v238
    %v303 = vpack.c.b16 %v247, %v243
    %v304 = vpack.c.b16 %v248, %v244
    %v305 = vpack.c.b16 %v249, %v245
    %v306 = vpack.c.b16 %v250, %v246
    %v307 = vpack.c.b16 %v255, %v251
    %v308 = vpack.c.b16 %v256, %v252
    %v309 = vpack.c.b16 %v257, %v253
    %v310 = vpack.c.b16 %v258, %v254
    %v311 = vpack.c.b16 %v263, %v259
    %v312 = vpack.c.b16 %v264, %v260
    %v313 = vpack.c.b16 %v265, %v261
    %v314 = vpack.c.b16 %v266, %v262
    %v315 = vpack.c.b16 %v271, %v267
    %v316 = vpack.c.b16 %v272, %v268
    %v317 = vpack.c.b16 %v273, %v269
    %v318 = vpack.c.b16 %v274, %v270
    %v319 = vpack.c.b16 %v279, %v275
    %v320 = vpack.c.b16 %v280, %v276
    %v321 = vpack.c.b16 %v281, %v277
    %v322 = vpack.c.b16 %v282, %v278
    %v323 = vpack.c.b16 %v287, %v283
    %v324 = vpack.c.b16 %v288, %v284
    %v325 = vpack.c.b16 %v289, %v285
    %v326 = vpack.c.b16 %v290, %v286
    %v327 = vpack.c.b16 %v295, %v291
    %v328 = vpack.c.b16 %v296, %v292
    %v329 = vpack.c.b16 %v297, %v293
    %v330 = vpack.c.b16 %v298, %v294
    %363 = vmatprep.subr.bf16.mxu0 %v300
    %364 = vmatpush1.bf16.msra.mxu0 %v299
    %365 = vmatprep.subr.bf16.mxu0 %v304
    %366 = vmatpush1.bf16.msra.mxu0 %v303
    %367 = vmatprep.subr.bf16.mxu0 %v308
    %368 = vmatpush1.bf16.msra.mxu0 %v307
    %369 = vmatprep.subr.bf16.mxu0 %v312
    %370 = vmatpush1.bf16.msra.mxu0 %v311
    %371 = vmatprep.subr.bf16.mxu0 %v316
    %372 = vmatpush1.bf16.msra.mxu0 %v315
    %373 = vmatprep.subr.bf16.mxu0 %v320
    %374 = vmatpush1.bf16.msra.mxu0 %v319
    %375 = vmatprep.subr.bf16.mxu0 %v324
    %376 = vmatpush1.bf16.msra.mxu0 %v323
    %377 = vmatprep.subr.bf16.mxu0 %v328
    %378 = vmatpush1.bf16.msra.mxu0 %v327
    %379 = vmatprep.subr.bf16.mxu0 0
    %380 = vmatpush1.bf16.msra.mxu0 0
    %381 = vmatprep.subr.bf16.mxu0 0
    %382 = vmatpush1.bf16.msra.mxu0 0
    %383 = vmatprep.subr.bf16.mxu0 0
    %384 = vmatpush1.bf16.msra.mxu0 0
    %385 = vmatprep.subr.bf16.mxu0 0
    %386 = vmatpush1.bf16.msra.mxu0 0
    %387 = vmatprep.subr.bf16.mxu0 0
    %388 = vmatpush1.bf16.msra.mxu0 0
    %389 = vmatprep.subr.bf16.mxu0 0
    %390 = vmatpush1.bf16.msra.mxu0 0
    %391 = vmatprep.subr.bf16.mxu0 0
    %392 = vmatpush1.bf16.msra.mxu0 0
    %393 = vmatprep.subr.bf16.mxu0 0
    %394 = vmatpush1.bf16.msra.mxu0 0
    %395 = vmatprep.mubr.bf16.mxu0 0
    %396 = vmatmul.mubr.bf16.gmra.mrb[0].mxu0 %v170
    %v397 = vpop.f32.mrb[0].mxu0
    %v398 = vadd.f32 0.0, %v397
    %v399 = vpop.f32.mrb[0].mxu0
    %v400 = vadd.f32 0.0, %v399
    %v401 = vpop.f32.mrb[0].mxu0
    %v402 = vpop.f32.mrb[0].mxu0
    %403 = vdwg.mxu0
    %404 = vmatprep.subr.bf16.mxu0 %v302
    %405 = vmatpush1.bf16.msra.mxu0 %v301
    %406 = vmatprep.subr.bf16.mxu0 %v306
    %407 = vmatpush1.bf16.msra.mxu0 %v305
    %408 = vmatprep.subr.bf16.mxu0 %v310
    %409 = vmatpush1.bf16.msra.mxu0 %v309
    %410 = vmatprep.subr.bf16.mxu0 %v314
    %411 = vmatpush1.bf16.msra.mxu0 %v313
    %412 = vmatprep.subr.bf16.mxu0 %v318
    %413 = vmatpush1.bf16.msra.mxu0 %v317
    %414 = vmatprep.subr.bf16.mxu0 %v322
    %415 = vmatpush1.bf16.msra.mxu0 %v321
    %416 = vmatprep.subr.bf16.mxu0 %v326
    %417 = vmatpush1.bf16.msra.mxu0 %v325
    %418 = vmatprep.subr.bf16.mxu0 %v330
    %419 = vmatpush1.bf16.msra.mxu0 %v329
    %420 = vmatprep.subr.bf16.mxu0 0
    %421 = vmatpush1.bf16.msra.mxu0 0
    %422 = vmatprep.subr.bf16.mxu0 0
    %423 = vmatpush1.bf16.msra.mxu0 0
    %424 = vmatprep.subr.bf16.mxu0 0
    %425 = vmatpush1.bf16.msra.mxu0 0
    %426 = vmatprep.subr.bf16.mxu0 0
    %427 = vmatpush1.bf16.msra.mxu0 0
    %428 = vmatprep.subr.bf16.mxu0 0
    %429 = vmatpush1.bf16.msra.mxu0 0
    %430 = vmatprep.subr.bf16.mxu0 0
    %431 = vmatpush1.bf16.msra.mxu0 0
    %432 = vmatprep.subr.bf16.mxu0 0
    %433 = vmatpush1.bf16.msra.mxu0 0
    %434 = vmatprep.subr.bf16.mxu0 0
    %435 = vmatpush1.bf16.msra.mxu0 0
    %436 = vmatprep.mubr.bf16.mxu0 0
    %437 = vmatmul.mubr.bf16.gmra.mrb[0].mxu0 %v170
    %v438 = vpop.f32.mrb[0].mxu0
    %v439 = vadd.f32 0.0, %v438
    %v440 = vpop.f32.mrb[0].mxu0
    %v441 = vadd.f32 0.0, %v440
    %v442 = vpop.f32.mrb[0].mxu0
    %v443 = vpop.f32.mrb[0].mxu0
    %444 = vdwg.mxu0
    %v477 = vunpack.c.l.b16 %v137
    %v478 = vunpack.c.h.b16 %v137
    %v479 = vunpack.c.l.b16 %v138
    %v480 = vunpack.c.h.b16 %v138
    %v481 = vunpack.c.l.b16 %v139
    %v482 = vunpack.c.h.b16 %v139
    %v483 = vunpack.c.l.b16 %v140
    %v484 = vunpack.c.h.b16 %v140
    %v485 = vunpack.c.l.b16 %v141
    %v486 = vunpack.c.h.b16 %v141
    %v487 = vunpack.c.l.b16 %v142
    %v488 = vunpack.c.h.b16 %v142
    %v489 = vunpack.c.l.b16 %v143
    %v490 = vunpack.c.h.b16 %v143
    %v491 = vunpack.c.l.b16 %v144
    %v492 = vunpack.c.h.b16 %v144
    %v493 = vunpack.c.l.b16 %v145
    %v494 = vunpack.c.h.b16 %v145
    %v495 = vunpack.c.l.b16 %v146
    %v496 = vunpack.c.h.b16 %v146
    %v497 = vunpack.c.l.b16 %v147
    %v498 = vunpack.c.h.b16 %v147
    %v499 = vunpack.c.l.b16 %v148
    %v500 = vunpack.c.h.b16 %v148
    %v501 = vunpack.c.l.b16 %v149
    %v502 = vunpack.c.h.b16 %v149
    %v503 = vunpack.c.l.b16 %v150
    %v504 = vunpack.c.h.b16 %v150
    %v505 = vunpack.c.l.b16 %v151
    %v506 = vunpack.c.h.b16 %v151
    %v507 = vunpack.c.l.b16 %v152
    %v508 = vunpack.c.h.b16 %v152
    %v509 = vunpack.c.l.b16 %v153
    %v510 = vunpack.c.h.b16 %v153
    %v511 = vunpack.c.l.b16 %v154
    %v512 = vunpack.c.h.b16 %v154
    %v513 = vunpack.c.l.b16 %v155
    %v514 = vunpack.c.h.b16 %v155
    %v515 = vunpack.c.l.b16 %v156
    %v516 = vunpack.c.h.b16 %v156
    %v517 = vunpack.c.l.b16 %v157
    %v518 = vunpack.c.h.b16 %v157
    %v519 = vunpack.c.l.b16 %v158
    %v520 = vunpack.c.h.b16 %v158
    %v521 = vunpack.c.l.b16 %v159
    %v522 = vunpack.c.h.b16 %v159
    %v523 = vunpack.c.l.b16 %v160
    %v524 = vunpack.c.h.b16 %v160
    %v525 = vunpack.c.l.b16 %v161
    %v526 = vunpack.c.h.b16 %v161
    %v527 = vunpack.c.l.b16 %v162
    %v528 = vunpack.c.h.b16 %v162
    %v529 = vunpack.c.l.b16 %v163
    %v530 = vunpack.c.h.b16 %v163
    %v531 = vunpack.c.l.b16 %v164
    %v532 = vunpack.c.h.b16 %v164
    %v533 = vunpack.c.l.b16 %v165
    %v534 = vunpack.c.h.b16 %v165
    %v535 = vunpack.c.l.b16 %v166
    %v536 = vunpack.c.h.b16 %v166
    %v537 = vunpack.c.l.b16 %v167
    %v538 = vunpack.c.h.b16 %v167
    %v539 = vunpack.c.l.b16 %v168
    %v540 = vunpack.c.h.b16 %v168
    %v541 = vpack.c.b16 %v481, %v477
    %v542 = vpack.c.b16 %v482, %v478
    %v543 = vpack.c.b16 %v483, %v479
    %v544 = vpack.c.b16 %v484, %v480
    %v545 = vpack.c.b16 %v489, %v485
    %v546 = vpack.c.b16 %v490, %v486
    %v547 = vpack.c.b16 %v491, %v487
    %v548 = vpack.c.b16 %v492, %v488
    %v549 = vpack.c.b16 %v497, %v493
    %v550 = vpack.c.b16 %v498, %v494
    %v551 = vpack.c.b16 %v499, %v495
    %v552 = vpack.c.b16 %v500, %v496
    %v553 = vpack.c.b16 %v505, %v501
    %v554 = vpack.c.b16 %v506, %v502
    %v555 = vpack.c.b16 %v507, %v503
    %v556 = vpack.c.b16 %v508, %v504
    %v557 = vpack.c.b16 %v513, %v509
    %v558 = vpack.c.b16 %v514, %v510
    %v559 = vpack.c.b16 %v515, %v511
    %v560 = vpack.c.b16 %v516, %v512
    %v561 = vpack.c.b16 %v521, %v517
    %v562 = vpack.c.b16 %v522, %v518
    %v563 = vpack.c.b16 %v523, %v519
    %v564 = vpack.c.b16 %v524, %v520
    %v565 = vpack.c.b16 %v529, %v525
    %v566 = vpack.c.b16 %v530, %v526
    %v567 = vpack.c.b16 %v531, %v527
    %v568 = vpack.c.b16 %v532, %v528
    %v569 = vpack.c.b16 %v537, %v533
    %v570 = vpack.c.b16 %v538, %v534
    %v571 = vpack.c.b16 %v539, %v535
    %v572 = vpack.c.b16 %v540, %v536
    %605 = vmatprep.subr.bf16.mxu0 %v542
    %606 = vmatpush1.bf16.msra.mxu0 %v541
    %607 = vmatprep.subr.bf16.mxu0 %v546
    %608 = vmatpush1.bf16.msra.mxu0 %v545
    %609 = vmatprep.subr.bf16.mxu0 %v550
    %610 = vmatpush1.bf16.msra.mxu0 %v549
    %611 = vmatprep.subr.bf16.mxu0 %v554
    %612 = vmatpush1.bf16.msra.mxu0 %v553
    %613 = vmatprep.subr.bf16.mxu0 %v558
    %614 = vmatpush1.bf16.msra.mxu0 %v557
    %615 = vmatprep.subr.bf16.mxu0 %v562
    %616 = vmatpush1.bf16.msra.mxu0 %v561
    %617 = vmatprep.subr.bf16.mxu0 %v566
    %618 = vmatpush1.bf16.msra.mxu0 %v565
    %619 = vmatprep.subr.bf16.mxu0 %v570
    %620 = vmatpush1.bf16.msra.mxu0 %v569
    %621 = vmatprep.subr.bf16.mxu0 0
    %622 = vmatpush1.bf16.msra.mxu0 0
    %623 = vmatprep.subr.bf16.mxu0 0
    %624 = vmatpush1.bf16.msra.mxu0 0
    %625 = vmatprep.subr.bf16.mxu0 0
    %626 = vmatpush1.bf16.msra.mxu0 0
    %627 = vmatprep.subr.bf16.mxu0 0
    %628 = vmatpush1.bf16.msra.mxu0 0
    %629 = vmatprep.subr.bf16.mxu0 0
    %630 = vmatpush1.bf16.msra.mxu0 0
    %631 = vmatprep.subr.bf16.mxu0 0
    %632 = vmatpush1.bf16.msra.mxu0 0
    %633 = vmatprep.subr.bf16.mxu0 0
    %634 = vmatpush1.bf16.msra.mxu0 0
    %635 = vmatprep.subr.bf16.mxu0 0
    %636 = vmatpush1.bf16.msra.mxu0 0
    %637 = vmatprep.mubr.bf16.mxu0 0
    %638 = vmatmul.mubr.bf16.gmra.mrb[0].mxu0 %v136
    %v639 = vpop.f32.mrb[0].mxu0
    %v640 = vadd.f32 %v398, %v639
    %v641 = vpop.f32.mrb[0].mxu0
    %v642 = vadd.f32 %v400, %v641
    %v643 = vpop.f32.mrb[0].mxu0
    %v644 = vpop.f32.mrb[0].mxu0
    %645 = vdwg.mxu0
    %646 = vmatprep.subr.bf16.mxu0 %v544
    %647 = vmatpush1.bf16.msra.mxu0 %v543
    %648 = vmatprep.subr.bf16.mxu0 %v548
    %649 = vmatpush1.bf16.msra.mxu0 %v547
    %650 = vmatprep.subr.bf16.mxu0 %v552
    %651 = vmatpush1.bf16.msra.mxu0 %v551
    %652 = vmatprep.subr.bf16.mxu0 %v556
    %653 = vmatpush1.bf16.msra.mxu0 %v555
    %654 = vmatprep.subr.bf16.mxu0 %v560
    %655 = vmatpush1.bf16.msra.mxu0 %v559
    %656 = vmatprep.subr.bf16.mxu0 %v564
    %657 = vmatpush1.bf16.msra.mxu0 %v563
    %658 = vmatprep.subr.bf16.mxu0 %v568
    %659 = vmatpush1.bf16.msra.mxu0 %v567
    %660 = vmatprep.subr.bf16.mxu0 %v572
    %661 = vmatpush1.bf16.msra.mxu0 %v571
    %662 = vmatprep.subr.bf16.mxu0 0
    %663 = vmatpush1.bf16.msra.mxu0 0
    %664 = vmatprep.subr.bf16.mxu0 0
    %665 = vmatpush1.bf16.msra.mxu0 0
    %666 = vmatprep.subr.bf16.mxu0 0
    %667 = vmatpush1.bf16.msra.mxu0 0
    %668 = vmatprep.subr.bf16.mxu0 0
    %669 = vmatpush1.bf16.msra.mxu0 0
    %670 = vmatprep.subr.bf16.mxu0 0
    %671 = vmatpush1.bf16.msra.mxu0 0
    %672 = vmatprep.subr.bf16.mxu0 0
    %673 = vmatpush1.bf16.msra.mxu0 0
    %674 = vmatprep.subr.bf16.mxu0 0
    %675 = vmatpush1.bf16.msra.mxu0 0
    %676 = vmatprep.subr.bf16.mxu0 0
    %677 = vmatpush1.bf16.msra.mxu0 0
    %678 = vmatprep.mubr.bf16.mxu0 0
    %679 = vmatmul.mubr.bf16.gmra.mrb[0].mxu0 %v136
    %v680 = vpop.f32.mrb[0].mxu0
    %v681 = vadd.f32 %v439, %v680
    %v682 = vpop.f32.mrb[0].mxu0
    %v683 = vadd.f32 %v441, %v682
    %v684 = vpop.f32.mrb[0].mxu0
    %v685 = vpop.f32.mrb[0].mxu0
    %686 = vdwg.mxu0
    %v687 = vld [vmem:[#allocation13] sm:$0xff]
    %v688 = vld [vmem:[#allocation13 + $0x8] sm:$0xff]
    %v689 = vld [vmem:[#allocation13 + $0x10] sm:$0xff]
    %v690 = vld [vmem:[#allocation13 + $0x18] sm:$0xff]
    %v691 = vadd.f32 %v640, %v687
    %v692 = vadd.f32 %v642, %v688
    %v693 = vadd.f32 %v681, %v689
    %v694 = vadd.f32 %v683, %v690
    %v695 = vxor.u32 %v691, 2147483648
    %v696 = vmul.f32 %v695, 1.442695
    %v697 = vpow.pop %v696
    %v698 = vadd.f32 %v697, 1.0
    %v699 = vrcp.pop %v698
    %v700 = vmul.f32 1.0, %v699
    %v701 = vxor.u32 %v692, 2147483648
    %v702 = vmul.f32 %v701, 1.442695
    %v703 = vpow.pop %v702
    %v704 = vadd.f32 %v703, 1.0
    %v705 = vrcp.pop %v704
    %v706 = vmul.f32 1.0, %v705
    %v707 = vtanh.pop %v693
    %v708 = vxor.u32 %v694, 2147483648
    %v709 = vmul.f32 %v708, 1.442695
    %v710 = vpow.pop %v709
    %v711 = vadd.f32 %v710, 1.0
    %v712 = vrcp.pop %v711
    %v713 = vmul.f32 1.0, %v712
    %v714 = vld [vmem:[#allocation9] sm:$0xff]
    %v715 = vmul.f32 %v706, %v714
    %v716 = vmul.f32 %v700, %v707
    %v717 = vadd.f32 %v715, %v716
    %v718 = vtanh.pop %v717
    %v719 = vmul.f32 %v713, %v718
    %s720 = smul.u32 4, 16
    %s721 = smul.u32 %s720, 2
    %s722 = sshll.u32 %s721, 4
    %723 = dma.done [#allocation3], %s722
    %v724 = vpack.c.bf16 %v719, %v719
    %v725 = vld [vmem:[#allocation2] sm:$0xff]
    %v726 = vld [vmem:[#allocation2 + $0x8] sm:$0xff]
    %v727 = vld [vmem:[#allocation2 + $0x10] sm:$0xff]
    %v728 = vld [vmem:[#allocation2 + $0x18] sm:$0xff]
    %v729 = vld [vmem:[#allocation2 + $0x20] sm:$0xff]
    %v730 = vld [vmem:[#allocation2 + $0x28] sm:$0xff]
    %v731 = vld [vmem:[#allocation2 + $0x30] sm:$0xff]
    %v732 = vld [vmem:[#allocation2 + $0x38] sm:$0xff]
    %v733 = vld [vmem:[#allocation2 + $0x40] sm:$0xff]
    %v734 = vld [vmem:[#allocation2 + $0x48] sm:$0xff]
    %v735 = vld [vmem:[#allocation2 + $0x50] sm:$0xff]
    %v736 = vld [vmem:[#allocation2 + $0x58] sm:$0xff]
    %v737 = vld [vmem:[#allocation2 + $0x60] sm:$0xff]
    %v738 = vld [vmem:[#allocation2 + $0x68] sm:$0xff]
    %v739 = vld [vmem:[#allocation2 + $0x70] sm:$0xff]
    %v740 = vld [vmem:[#allocation2 + $0x78] sm:$0xff]
    %v741 = vld [vmem:[#allocation13 + $0x20] sm:$0xff]
    %v742 = vld [vmem:[#allocation13 + $0x28] sm:$0xff]
    %743 = vmatprep.subr.bf16.mxu0 %v726
    %744 = vmatpush1.bf16.msra.mxu0 %v725
    %745 = vmatprep.subr.bf16.mxu0 %v728
    %746 = vmatpush1.bf16.msra.mxu0 %v727
    %747 = vmatprep.subr.bf16.mxu0 %v730
    %748 = vmatpush1.bf16.msra.mxu0 %v729
    %749 = vmatprep.subr.bf16.mxu0 %v732
    %750 = vmatpush1.bf16.msra.mxu0 %v731
    %751 = vmatprep.subr.bf16.mxu0 %v734
    %752 = vmatpush1.bf16.msra.mxu0 %v733
    %753 = vmatprep.subr.bf16.mxu0 %v736
    %754 = vmatpush1.bf16.msra.mxu0 %v735
    %755 = vmatprep.subr.bf16.mxu0 %v738
    %756 = vmatpush1.bf16.msra.mxu0 %v737
    %757 = vmatprep.subr.bf16.mxu0 %v740
    %758 = vmatpush1.bf16.msra.mxu0 %v739
    %759 = vmatprep.subr.bf16.mxu0 0
    %760 = vmatpush1.bf16.msra.mxu0 0
    %761 = vmatprep.subr.bf16.mxu0 0
    %762 = vmatpush1.bf16.msra.mxu0 0
    %763 = vmatprep.subr.bf16.mxu0 0
    %764 = vmatpush1.bf16.msra.mxu0 0
    %765 = vmatprep.subr.bf16.mxu0 0
    %766 = vmatpush1.bf16.msra.mxu0 0
    %767 = vmatprep.subr.bf16.mxu0 0
    %768 = vmatpush1.bf16.msra.mxu0 0
    %769 = vmatprep.subr.bf16.mxu0 0
    %770 = vmatpush1.bf16.msra.mxu0 0
    %771 = vmatprep.subr.bf16.mxu0 0
    %772 = vmatpush1.bf16.msra.mxu0 0
    %773 = vmatprep.subr.bf16.mxu0 0
    %774 = vmatpush1.bf16.msra.mxu0 0
    %775 = vmatprep.mubr.bf16.mxu0 0
    %776 = vmatmul.mubr.bf16.gmra.mrb[0].mxu0 %v724
    %v777 = vpop.f32.mrb[0].mxu0
    %v778 = vadd.f32 %v741, %v777
    %v779 = vpop.f32.mrb[0].mxu0
    %v780 = vadd.f32 %v742, %v779
    %v781 = vpop.f32.mrb[0].mxu0
    %v782 = vpop.f32.mrb[0].mxu0
    %783 = vdwg.mxu0
    %784 = vst [vmem:[#allocation15] sm:$0xff] %v778
    %v785 = vxor.u32 %v780, 2147483648
    %v786 = vmul.f32 %v785, 1.442695
    %v787 = vpow.pop %v786
    %v788 = vadd.f32 %v787, 1.0
    %v789 = vrcp.pop %v788
    %v790 = vmul.f32 1.0, %v789
    %791 = vst [vmem:[#allocation15 + $0x8] sm:$0xff] %v790
    %792 = vst [vmem:[#allocation15 + $0x10] sm:$0xff] %v719
    %793 = vst [vmem:[#allocation15 + $0x18] sm:$0xff] %v717
    // Predicated region
    $region50: #{tpu_custom_call.1} parent=1 // pred_check
      _
    $region51: #{tpu_custom_call.1} parent=1 // pred_check_branch
      %795 = sbr.rel (0) target = $region53
    $region52: #{tpu_custom_call.1} parent=1 // pred_region
      %s797 = ssub.s32 512, 512
      %798 = vsyncadd [#allocation6], %s797
      %s800 = sshll.u32 [#allocation15], 4
      %s801 = int_to_ptr.vmem [resolvable:$true] %s800
      %803 = dma.vmem_to_hbm [thread:$0]  %s801, 512, %s7, [#allocation6]
    $region53: #{tpu_custom_call.1} parent=1 // pred_fallthru
      _
    // Predicated region
    $region54: #{tpu_custom_call.1} parent=1 // pred_check
      _
    $region55: #{tpu_custom_call.1} parent=1 // pred_check_branch
      %805 = sbr.rel (0) target = $region57
    $region56: #{tpu_custom_call.1} parent=1 // pred_region
      %806 = dma.done [#allocation6], 512
    $region57: #{tpu_custom_call.1} parent=1 // pred_fallthru
      _
    %807 = vsyncpa [#allocation5], 1
    %808 = vsyncpa [#allocation8], 1
    %809 = vsyncpa [#allocation11], 1
    %810 = vsyncpa [#allocation14], 1
    %811 = vsyncpa [#allocation6], 1
  %812 = vsyncmov [#allocation3]
  %s813 = vpop.sfrf %812
  %p814 = scmp.eq.s32.totalorder %s813, 0
  %p815 = pneg %p814
  %817 = shalt.err (%p815)

</llo_original>
